<compile_context>
chip_gen: v6e
topology: v6e:2x2x1
jax: 0.10.0
libtpu: 0.0.40
codegen_flags: <defaults>
</compile_context>

<pallas_src>
import random
from functools import lru_cache
from typing import Dict, List, Optional, Tuple, Union

import numpy as np
import jax
import jax.numpy as jnp
from jax.experimental import pallas as pl
from jax.experimental.pallas import tpu as pltpu

FRAME_KEY = "frames"


# ---------------------------------------------------------------------------
# Pallas kernel: per-sample row/col gather (crop + nearest resize + inpaint)
# ---------------------------------------------------------------------------
def _make_gather_kernel(c_blk: int, fill_value: float):
    def kernel(rows_ref, cols_ref, x_ref, o_ref):
        # rows_ref: (1, H, 1) int32 -- source row per output row (-1 => fill)
        # cols_ref: (1, 1, W) int32 -- source col per output col (-1 => fill)
        # x_ref / o_ref: (1, c_blk, H, W)
        H = x_ref.shape[2]
        W = x_ref.shape[3]
        rows = rows_ref[0]          # (H, 1) int32
        cols = cols_ref[0]          # (1, W) int32

        # One-hot selection matrices; gather becomes exact MXU matmuls.
        # R[i, r] = 1 iff rows[i] == r          (H_out, H_in)
        R = (jnp.broadcast_to(rows, (H, H))
             == jax.lax.broadcasted_iota(jnp.int32, (H, H), 1)).astype(jnp.float32)
        # CT[s, j] = 1 iff cols[j] == s         (W_in, W_out)
        CT = (jax.lax.broadcasted_iota(jnp.int32, (W, W), 0)
              == jnp.broadcast_to(cols, (W, W))).astype(jnp.float32)

        valid = jnp.logical_and(rows >= 0, cols >= 0)   # (H, W) via broadcast
        fill = jnp.float32(fill_value)

        # Static unroll over the channel block (kept small by _pick_channel_block).
        for c in range(c_blk):
            xc = x_ref[0, c].astype(jnp.float32)                       # (H, W)
            g = jnp.dot(jnp.dot(R, xc, preferred_element_type=jnp.float32), CT,
                        preferred_element_type=jnp.float32)            # (H, W)
            o_ref[0, c] = jnp.where(valid, g, fill).astype(o_ref.dtype)

    return kernel


def _pick_channel_block(C: int, H: int, W: int, itemsize: int,
                        max_unroll: int = 16, budget_bytes: int = 2 << 20) -> int:
    # Fold as many channels as possible into one block (fewer grid steps), but keep
    # each block ~<=2 MiB so double-buffered in+out blocks plus f32 temporaries stay
    # far below v7x's smaller VMEM.  Must divide C.
    c_blk = max(1, min(C, max_unroll, budget_bytes // max(1, H * W * itemsize)))
    while C % c_blk:
        c_blk -= 1
    return c_blk


@lru_cache(maxsize=None)
def _build_gather_call(N: int, C: int, H: int, W: int, dtype_name: str,
                       c_blk: int, fill_value: float):
    dtype = jnp.dtype(dtype_name)
    itemsize = dtype.itemsize
    kernel = _make_gather_kernel(c_blk, fill_value)
    cost = pl.CostEstimate(
        flops=2 * N * C * (H * H * W + H * W * W),
        transcendentals=0,
        bytes_accessed=2 * N * C * H * W * itemsize + 4 * N * (H + W),
    )
    return pl.pallas_call(
        kernel,
        out_shape=jax.ShapeDtypeStruct((N, C, H, W), dtype),
        grid_spec=pltpu.PrefetchScalarGridSpec(
            num_scalar_prefetch=0,
            grid=(N, C // c_blk),
            in_specs=[
                # Last two block dims equal the full array dims -> (8,128) rule ok.
                pl.BlockSpec((1, H, 1), lambda n, c: (n, 0, 0)),
                pl.BlockSpec((1, 1, W), lambda n, c: (n, 0, 0)),
                pl.BlockSpec((1, c_blk, H, W), lambda n, c: (n, c, 0, 0)),
            ],
            out_specs=pl.BlockSpec((1, c_blk, H, W), lambda n, c: (n, c, 0, 0)),
        ),
        compiler_params=pltpu.CompilerParams(
            dimension_semantics=("parallel", "parallel"),
            vmem_limit_bytes=32 * 1024 * 1024,
        ),
        cost_estimate=cost,
    )


def gather_resize(x: jax.Array, rows: np.ndarray, cols: np.ndarray,
                  fill_value: float = 0.0) -> jax.Array:
    """out[n,c,i,j] = x[n,c,rows[n,i],cols[n,j]] if rows/cols >= 0 else fill_value."""
    N, C, H, W = x.shape
    itemsize = jnp.dtype(x.dtype).itemsize
    c_blk = _pick_channel_block(C, H, W, itemsize)
    call = _build_gather_call(N, C, H, W, jnp.dtype(x.dtype).name, c_blk,
                              float(fill_value))
    rows3 = jnp.asarray(np.asarray(rows, np.int32).reshape(N, H, 1))
    cols3 = jnp.asarray(np.asarray(cols, np.int32).reshape(N, 1, W))
    return call(rows3, cols3, x)


# ---------------------------------------------------------------------------
# Host-side module mirroring RandomResizedCropWithProb
# ---------------------------------------------------------------------------
def check_batch(batch: Dict[str, jax.Array], target_keys: List[str]):
    if len(target_keys) > 1 and not all(
        batch[target_keys[0]].shape[-2:] == batch[target_keys[i]].shape[-2:]
        for i in range(1, len(target_keys))
    ):
        raise RuntimeError(
            "Can't augment to due dimension inequality, augment separately instead.")


class RandomResizedCropWithProbPallas:
    """JAX/Pallas mirror of RandomResizedCropWithProb operating on a dict batch."""

    def __init__(self, size: Union[List[float], Tuple[int, int]],
                 probability: float = 0.5,
                 target_keys: Optional[List[str]] = None,
                 inpaint_val_dict: Optional[Dict[str, Union[int, float]]] = None):
        if isinstance(size, list) and size[1] > 1 and inpaint_val_dict is None:
            raise RuntimeError("Inpaint value must be set up if change factor > 1.")
        self.size = size
        self.probability = probability
        self.target_keys = target_keys if target_keys is not None else [FRAME_KEY]
        self.inpaint_val_dict = inpaint_val_dict
        # Last sampled per-sample gather maps (exposed for testing).
        self.last_rows: Optional[np.ndarray] = None
        self.last_cols: Optional[np.ndarray] = None

    # TODO(synk): parameter sampling (probability / crop position / scale factor)
    # uses host-side Python `random`, exactly like the reference module; it is not
    # fused into the kernel.
    def _sample_index_maps(self, N: int, H: int, W: int):
        rows = np.tile(np.arange(H, dtype=np.int32), (N, 1))
        cols = np.tile(np.arange(W, dtype=np.int32), (N, 1))
        out_r = np.arange(H)
        out_c = np.arange(W)
        for i in range(N):
            if random.random() >= self.probability:
                continue  # identity for this sample
            is_inpaint = False
            if isinstance(self.size, list):
                change_factor = random.uniform(self.size[0], self.size[1])
                if change_factor > 1:
                    change_factor = 1.0 / change_factor
                    is_inpaint = True
                size = (int(H * change_factor), int(W * change_factor))
            else:
                size = (int(self.size[0]), int(self.size[1]))
            if is_inpaint:
                new_h, new_w = size
                top_m = random.randint(0, H - new_h)
                left_m = random.randint(0, W - new_w)
                # NEAREST down-resize of the full image + random-position inpaint pad.
                rows[i] = np.where((out_r >= top_m) & (out_r < top_m + new_h),
                                   ((out_r - top_m) * H) // new_h, -1)
                cols[i] = np.where((out_c >= left_m) & (out_c < left_m + new_w),
                                   ((out_c - left_m) * W) // new_w, -1)
            else:
                th, tw = size
                # transforms.RandomCrop.get_params
                top = random.randint(0, H - th)
                left = random.randint(0, W - tw)
                # crop(top, left, th, tw) then NEAREST resize back to (H, W):
                # src = offset + floor(dst * crop_size / out_size)
                rows[i] = top + (out_r * th) // H
                cols[i] = left + (out_c * tw) // W
        return rows, cols

    def __call__(self, batch: Dict[str, jax.Array]) -> Dict[str, jax.Array]:
        check_batch(batch, self.target_keys)
        lead = batch[self.target_keys[0]]
        N = lead.shape[0]
        H, W = lead.shape[-2], lead.shape[-1]
        rows, cols = self._sample_index_maps(N, H, W)
        self.last_rows, self.last_cols = rows, cols
        out = dict(batch)  # do not mutate the caller's dict in place
        for key in self.target_keys:
            fill = 0.0
            if self.inpaint_val_dict is not None and key in self.inpaint_val_dict:
                fill = float(self.inpaint_val_dict[key])
            out[key] = gather_resize(batch[key], rows, cols, fill)
        return out


# ---------------------------------------------------------------------------
# Self-test
# ---------------------------------------------------------------------------
def _gather_reference(x, rows, cols, fill):
    x = np.asarray(x)
    N, C, H, W = x.shape
    out = np.empty_like(x)
    for n in range(N):
        r = np.asarray(rows[n])
        c = np.asarray(cols[n])
        g = x[n][:, np.clip(r, 0, H - 1)[:, None], np.clip(c, 0, W - 1)[None, :]]
        valid = (r[:, None] >= 0) & (c[None, :] >= 0)
        out[n] = np.where(valid[None], g, np.asarray(fill, dtype=x.dtype))
    return out


if __name__ == "__main__":
    random.seed(0)
    key = jax.random.PRNGKey(0)
    k1, k2 = jax.random.split(key)
    frames = jax.random.normal(k1, (2, 4, 16, 16), dtype=jnp.float32)
    masks = jax.random.normal(k2, (2, 1, 16, 16), dtype=jnp.float32)
    batch = {"frames": frames, "masks": masks}

    # 1) fixed-size random crop + NEAREST upsize, always applied, shared params.
    aug_crop = RandomResizedCropWithProbPallas(size=(8, 8), probability=1.0,
                                               target_keys=["frames", "masks"])
    out1 = aug_crop(batch)
    jax.block_until_ready(out1["frames"])
    jax.block_until_ready(out1["masks"])
    ref_f = _gather_reference(frames, aug_crop.last_rows, aug_crop.last_cols, 0.0)
    ref_m = _gather_reference(masks, aug_crop.last_rows, aug_crop.last_cols, 0.0)
    assert out1["frames"].shape == frames.shape and out1["frames"].dtype == frames.dtype
    np.testing.assert_allclose(np.asarray(out1["frames"]), ref_f, rtol=1e-6, atol=1e-6)
    np.testing.assert_allclose(np.asarray(out1["masks"]), ref_m, rtol=1e-6, atol=1e-6)

    # 2) scale interval > 1 -> NEAREST downsize + randomly positioned inpaint pad.
    aug_inp = RandomResizedCropWithProbPallas(size=[1.25, 2.0], probability=1.0,
                                              target_keys=["frames"],
                                              inpaint_val_dict={"frames": 0.5})
    out2 = aug_inp(batch)
    jax.block_until_ready(out2["frames"])
    ref2 = _gather_reference(frames, aug_inp.last_rows, aug_inp.last_cols, 0.5)
    np.testing.assert_allclose(np.asarray(out2["frames"]), ref2, rtol=1e-6, atol=1e-6)
    assert np.any(aug_inp.last_rows < 0) and np.any(aug_inp.last_cols < 0)

    # 3) probability 0 -> identity pass-through.
    aug_off = RandomResizedCropWithProbPallas(size=(8, 8), probability=0.0,
                                              target_keys=["frames"])
    out3 = aug_off(batch)
    jax.block_until_ready(out3["frames"])
    np.testing.assert_allclose(np.asarray(out3["frames"]), np.asarray(frames),
                               rtol=1e-6, atol=1e-6)

    print("KERNEL_OK")
</pallas_src>

<mosaic_0001>
module attributes {stable_mosaic.version = 11 : i64} {
  func.func @kernel(%arg0: i32, %arg1: i32, %arg2: memref<1x16x1xi32, #tpu.memory_space<vmem>>, %arg3: memref<1x1x16xi32, #tpu.memory_space<vmem>>, %arg4: memref<1x4x16x16xf32, #tpu.memory_space<vmem>>, %arg5: memref<1x4x16x16xf32, #tpu.memory_space<vmem>>) attributes {dimension_semantics = [#tpu.dimension_semantics<parallel>, #tpu.dimension_semantics<parallel>], iteration_bounds = array<i64: 2, 1>, scalar_prefetch = 0 : i64, scratch_operands = 0 : i64, tpu.core_type = #tpu.core_type<tc>, window_params = [{transform_indices = @transform_0, window_bounds = array<i64: 1, 16, 1>}, {transform_indices = @transform_1, window_bounds = array<i64: 1, 1, 16>}, {transform_indices = @transform_2, window_bounds = array<i64: 1, 4, 16, 16>}, {transform_indices = @transform_3, window_bounds = array<i64: 1, 4, 16, 16>}]} {
    %c0 = arith.constant 0 : index
    %c0_0 = arith.constant 0 : index
    %c0_1 = arith.constant 0 : index
    %0 = vector.load %arg2[%c0, %c0_0, %c0_1] : memref<1x16x1xi32, #tpu.memory_space<vmem>>, vector<1x16x1xi32>
    %1 = vector.shape_cast %0 : vector<1x16x1xi32> to vector<16x1xi32>
    %c0_2 = arith.constant 0 : index
    %c0_3 = arith.constant 0 : index
    %c0_4 = arith.constant 0 : index
    %2 = vector.load %arg3[%c0_2, %c0_3, %c0_4] : memref<1x1x16xi32, #tpu.memory_space<vmem>>, vector<1x1x16xi32>
    %3 = vector.shape_cast %2 : vector<1x1x16xi32> to vector<1x16xi32>
    %4 = vector.shape_cast %1 : vector<16x1xi32> to vector<16x1xi32>
    %5 = vector.broadcast %4 : vector<16x1xi32> to vector<16x16xi32>
    %6 = tpu.iota {dimensions = array<i32: 1>} : vector<16x16xi32>
    %7 = arith.cmpi eq, %5, %6 : vector<16x16xi32>
    %8 = arith.extui %7 : vector<16x16xi1> to vector<16x16xi32>
    %9 = arith.sitofp %8 : vector<16x16xi32> to vector<16x16xf32>
    %10 = tpu.iota {dimensions = array<i32: 0>} : vector<16x16xi32>
    %11 = vector.shape_cast %3 : vector<1x16xi32> to vector<1x16xi32>
    %12 = vector.broadcast %11 : vector<1x16xi32> to vector<16x16xi32>
    %13 = arith.cmpi eq, %10, %12 : vector<16x16xi32>
    %14 = arith.extui %13 : vector<16x16xi1> to vector<16x16xi32>
    %15 = arith.sitofp %14 : vector<16x16xi32> to vector<16x16xf32>
    %c0_i32 = arith.constant 0 : i32
    %16 = vector.broadcast %c0_i32 : i32 to vector<16x1xi32>
    %17 = arith.cmpi sge, %1, %16 : vector<16x1xi32>
    %c0_i32_5 = arith.constant 0 : i32
    %18 = vector.broadcast %c0_i32_5 : i32 to vector<1x16xi32>
    %19 = arith.cmpi sge, %3, %18 : vector<1x16xi32>
    %20 = vector.broadcast %17 : vector<16x1xi1> to vector<16x16xi1>
    %21 = vector.broadcast %19 : vector<1x16xi1> to vector<16x16xi1>
    %22 = arith.andi %20, %21 : vector<16x16xi1>
    %c0_6 = arith.constant 0 : index
    %c0_7 = arith.constant 0 : index
    %c0_8 = arith.constant 0 : index
    %c0_9 = arith.constant 0 : index
    %23 = vector.load %arg4[%c0_6, %c0_7, %c0_8, %c0_9] : memref<1x4x16x16xf32, #tpu.memory_space<vmem>>, vector<1x1x16x16xf32>
    %24 = vector.shape_cast %23 : vector<1x1x16x16xf32> to vector<16x16xf32>
    %cst = arith.constant dense<0.000000e+00> : vector<16x16xf32>
    %25 = tpu.matmul %9, %24, %cst {dimension_numbers = #tpu.dot_dimension_numbers<[1], [0], [0], [1], [0, 0, 1, 1], [], []>} : vector<16x16xf32>, vector<16x16xf32>, vector<16x16xf32> -> vector<16x16xf32>
    %cst_10 = arith.constant dense<0.000000e+00> : vector<16x16xf32>
    %26 = tpu.matmul %25, %15, %cst_10 {dimension_numbers = #tpu.dot_dimension_numbers<[1], [0], [0], [1], [0, 0, 1, 1], [], []>} : vector<16x16xf32>, vector<16x16xf32>, vector<16x16xf32> -> vector<16x16xf32>
    %cst_11 = arith.constant 0.000000e+00 : f32
    %27 = vector.broadcast %cst_11 : f32 to vector<16x16xf32>
    %28 = arith.select %22, %26, %27 : vector<16x16xi1>, vector<16x16xf32>
    %c0_12 = arith.constant 0 : index
    %c0_13 = arith.constant 0 : index
    %c0_14 = arith.constant 0 : index
    %c0_15 = arith.constant 0 : index
    %29 = vector.load %arg5[%c0_12, %c0_13, %c0_14, %c0_15] : memref<1x4x16x16xf32, #tpu.memory_space<vmem>>, vector<1x1x16x16xf32>
    %30 = vector.shape_cast %29 : vector<1x1x16x16xf32> to vector<16x16xf32>
    %31 = vector.shape_cast %28 : vector<16x16xf32> to vector<1x1x16x16xf32>
    tpu.vector_store %arg5[%c0_12, %c0_13, %c0_14, %c0_15], %31 {strides = array<i32>} : memref<1x4x16x16xf32, #tpu.memory_space<vmem>>, vector<1x1x16x16xf32>,
    %c0_16 = arith.constant 0 : index
    %c1 = arith.constant 1 : index
    %c0_17 = arith.constant 0 : index
    %c0_18 = arith.constant 0 : index
    %32 = vector.load %arg4[%c0_16, %c1, %c0_17, %c0_18] : memref<1x4x16x16xf32, #tpu.memory_space<vmem>>, vector<1x1x16x16xf32>
    %33 = vector.shape_cast %32 : vector<1x1x16x16xf32> to vector<16x16xf32>
    %cst_19 = arith.constant dense<0.000000e+00> : vector<16x16xf32>
    %34 = tpu.matmul %9, %33, %cst_19 {dimension_numbers = #tpu.dot_dimension_numbers<[1], [0], [0], [1], [0, 0, 1, 1], [], []>} : vector<16x16xf32>, vector<16x16xf32>, vector<16x16xf32> -> vector<16x16xf32>
    %cst_20 = arith.constant dense<0.000000e+00> : vector<16x16xf32>
    %35 = tpu.matmul %34, %15, %cst_20 {dimension_numbers = #tpu.dot_dimension_numbers<[1], [0], [0], [1], [0, 0, 1, 1], [], []>} : vector<16x16xf32>, vector<16x16xf32>, vector<16x16xf32> -> vector<16x16xf32>
    %cst_21 = arith.constant 0.000000e+00 : f32
    %36 = vector.broadcast %cst_21 : f32 to vector<16x16xf32>
    %37 = arith.select %22, %35, %36 : vector<16x16xi1>, vector<16x16xf32>
    %c0_22 = arith.constant 0 : index
    %c1_23 = arith.constant 1 : index
    %c0_24 = arith.constant 0 : index
    %c0_25 = arith.constant 0 : index
    %38 = vector.load %arg5[%c0_22, %c1_23, %c0_24, %c0_25] : memref<1x4x16x16xf32, #tpu.memory_space<vmem>>, vector<1x1x16x16xf32>
    %39 = vector.shape_cast %38 : vector<1x1x16x16xf32> to vector<16x16xf32>
    %40 = vector.shape_cast %37 : vector<16x16xf32> to vector<1x1x16x16xf32>
    tpu.vector_store %arg5[%c0_22, %c1_23, %c0_24, %c0_25], %40 {strides = array<i32>} : memref<1x4x16x16xf32, #tpu.memory_space<vmem>>, vector<1x1x16x16xf32>,
    %c0_26 = arith.constant 0 : index
    %c2 = arith.constant 2 : index
    %c0_27 = arith.constant 0 : index
    %c0_28 = arith.constant 0 : index
    %41 = vector.load %arg4[%c0_26, %c2, %c0_27, %c0_28] : memref<1x4x16x16xf32, #tpu.memory_space<vmem>>, vector<1x1x16x16xf32>
    %42 = vector.shape_cast %41 : vector<1x1x16x16xf32> to vector<16x16xf32>
    %cst_29 = arith.constant dense<0.000000e+00> : vector<16x16xf32>
    %43 = tpu.matmul %9, %42, %cst_29 {dimension_numbers = #tpu.dot_dimension_numbers<[1], [0], [0], [1], [0, 0, 1, 1], [], []>} : vector<16x16xf32>, vector<16x16xf32>, vector<16x16xf32> -> vector<16x16xf32>
    %cst_30 = arith.constant dense<0.000000e+00> : vector<16x16xf32>
    %44 = tpu.matmul %43, %15, %cst_30 {dimension_numbers = #tpu.dot_dimension_numbers<[1], [0], [0], [1], [0, 0, 1, 1], [], []>} : vector<16x16xf32>, vector<16x16xf32>, vector<16x16xf32> -> vector<16x16xf32>
    %cst_31 = arith.constant 0.000000e+00 : f32
    %45 = vector.broadcast %cst_31 : f32 to vector<16x16xf32>
    %46 = arith.select %22, %44, %45 : vector<16x16xi1>, vector<16x16xf32>
    %c0_32 = arith.constant 0 : index
    %c2_33 = arith.constant 2 : index
    %c0_34 = arith.constant 0 : index
    %c0_35 = arith.constant 0 : index
    %47 = vector.load %arg5[%c0_32, %c2_33, %c0_34, %c0_35] : memref<1x4x16x16xf32, #tpu.memory_space<vmem>>, vector<1x1x16x16xf32>
    %48 = vector.shape_cast %47 : vector<1x1x16x16xf32> to vector<16x16xf32>
    %49 = vector.shape_cast %46 : vector<16x16xf32> to vector<1x1x16x16xf32>
    tpu.vector_store %arg5[%c0_32, %c2_33, %c0_34, %c0_35], %49 {strides = array<i32>} : memref<1x4x16x16xf32, #tpu.memory_space<vmem>>, vector<1x1x16x16xf32>,
    %c0_36 = arith.constant 0 : index
    %c3 = arith.constant 3 : index
    %c0_37 = arith.constant 0 : index
    %c0_38 = arith.constant 0 : index
    %50 = vector.load %arg4[%c0_36, %c3, %c0_37, %c0_38] : memref<1x4x16x16xf32, #tpu.memory_space<vmem>>, vector<1x1x16x16xf32>
    %51 = vector.shape_cast %50 : vector<1x1x16x16xf32> to vector<16x16xf32>
    %cst_39 = arith.constant dense<0.000000e+00> : vector<16x16xf32>
    %52 = tpu.matmul %9, %51, %cst_39 {dimension_numbers = #tpu.dot_dimension_numbers<[1], [0], [0], [1], [0, 0, 1, 1], [], []>} : vector<16x16xf32>, vector<16x16xf32>, vector<16x16xf32> -> vector<16x16xf32>
    %cst_40 = arith.constant dense<0.000000e+00> : vector<16x16xf32>
    %53 = tpu.matmul %52, %15, %cst_40 {dimension_numbers = #tpu.dot_dimension_numbers<[1], [0], [0], [1], [0, 0, 1, 1], [], []>} : vector<16x16xf32>, vector<16x16xf32>, vector<16x16xf32> -> vector<16x16xf32>
    %cst_41 = arith.constant 0.000000e+00 : f32
    %54 = vector.broadcast %cst_41 : f32 to vector<16x16xf32>
    %55 = arith.select %22, %53, %54 : vector<16x16xi1>, vector<16x16xf32>
    %c0_42 = arith.constant 0 : index
    %c3_43 = arith.constant 3 : index
    %c0_44 = arith.constant 0 : index
    %c0_45 = arith.constant 0 : index
    %56 = vector.load %arg5[%c0_42, %c3_43, %c0_44, %c0_45] : memref<1x4x16x16xf32, #tpu.memory_space<vmem>>, vector<1x1x16x16xf32>
    %57 = vector.shape_cast %56 : vector<1x1x16x16xf32> to vector<16x16xf32>
    %58 = vector.shape_cast %55 : vector<16x16xf32> to vector<1x1x16x16xf32>
    tpu.vector_store %arg5[%c0_42, %c3_43, %c0_44, %c0_45], %58 {strides = array<i32>} : memref<1x4x16x16xf32, #tpu.memory_space<vmem>>, vector<1x1x16x16xf32>,
    return
  }
  func.func @transform_0(%arg0: i32, %arg1: i32) -> (i32, i32, i32) {
    %c0_i32 = arith.constant 0 : i32
    %c0_i32_0 = arith.constant 0 : i32
    %c0_i32_1 = arith.constant 0 : i32
    return %arg0, %c0_i32, %c0_i32_0 : i32, i32, i32
  }
  func.func @transform_1(%arg0: i32, %arg1: i32) -> (i32, i32, i32) {
    %c0_i32 = arith.constant 0 : i32
    %c0_i32_0 = arith.constant 0 : i32
    %c0_i32_1 = arith.constant 0 : i32
    return %arg0, %c0_i32, %c0_i32_0 : i32, i32, i32
  }
  func.func @transform_2(%arg0: i32, %arg1: i32) -> (i32, i32, i32, i32) {
    %c0_i32 = arith.constant 0 : i32
    %c0_i32_0 = arith.constant 0 : i32
    %c0_i32_1 = arith.constant 0 : i32
    return %arg0, %arg1, %c0_i32, %c0_i32_0 : i32, i32, i32, i32
  }
  func.func @transform_3(%arg0: i32, %arg1: i32) -> (i32, i32, i32, i32) {
    %c0_i32 = arith.constant 0 : i32
    %c0_i32_0 = arith.constant 0 : i32
    %c0_i32_1 = arith.constant 0 : i32
    return %arg0, %arg1, %c0_i32, %c0_i32_0 : i32, i32, i32, i32
  }
}

</mosaic_0001>

<llo_original>
// kernel: tpu_custom_call.1
$region0: #{tpu_custom_call.1}
  #allocation0 [shape = 'u32[]', space=smem, size = 0x4, offset = 0x4, fixed_abs, tag = 'smem constant byte address 0x4 - core index']
  #allocation1 [shape = 'u32[144,128]{1,0:T(1,128)}', space=vmem, size = 0x12000, scoped, tag = 'internal scratch']
  %s0 = inlined_call_operand.vmem [shape: s32[2,16,1], index: 0, kind: input, shape index: {}]
  %s1 = inlined_call_operand.vmem [shape: s32[2,1,16], index: 1, kind: input, shape index: {}]
  %s2 = inlined_call_operand.hbm [shape: f32[2,4,16,16], index: 2, kind: input, shape index: {}]
  %s3 = inlined_call_operand.hbm [shape: f32[2,4,16,16], index: 3, kind: output, shape index: {}]
  %s4 = sld [smem:[#allocation0]]
  $region49: #{tpu_custom_call.1} parent=0
    _
  %s6 = ssub.s32 1, %s4
  %s7 = scalar_select 0, %s6, %s4
  $region1: #{tpu_custom_call.1} parent=0
    #allocation2 [shape = 'u8[65536]{0}', space=vmem, size = 0x10000, scoped, tag = 'input window, operand 2']
    #allocation3 [shape = 's32[2]{0}', space=sflag, size = 0x8, scoped, tag = 'scoped memory for tpu_custom_call.1']
    #allocation4 [shape = 's32[2]{0}', space=sflag, size = 0x8, scoped, tag = 'scoped memory for tpu_custom_call.1']
    #allocation5 [shape = 'u8[65536]{0}', space=vmem, size = 0x10000, scoped, tag = 'output window, operand 0']
    %8 = vsyncpa [#allocation3], 0
    %s9 = scalar_lea.sflag [#allocation3], 1
    %10 = vsyncpa %s9, 0
    %11 = vsyncpa [#allocation4], 0
    %s12 = scalar_lea.sflag [#allocation4], 1
    %13 = vsyncpa %s12, 0
    loop: start=0, step=1, limit=4
    $region2: #{tpu_custom_call.1} parent=1 // loop_pre_header
      _
    $region3: #{tpu_custom_call.1} parent=1 // loop_header
      %s15 = sphi 0, %s19
      %p16 = scmp.ge.s32.totalorder %s15, 4
      %s22 = sphi 0, %s34
      %s23 = sphi 0, %s30
      %s24 = sphi 0, %s22
      %s25 = sphi 0, %s23
      %s26 = sphi 0, %s24
      %s27 = sphi 0, %s25
      %s37 = sphi 0, %s39
      %s40 = sphi 0, %s37
      %s41 = sphi 0, %s40
      %s57 = sphi 0, %s41
      %s63 = sphi 0, %s65
      %s66 = sphi 0, %s63
      %s67 = sphi 0, %s66
      %s83 = sphi 0, %s67
      %s91 = sphi 0, %s93
      %s94 = sphi 0, %s91
      %s95 = sphi 0, %s94
      %s111 = sphi 0, %s95
      %s119 = sphi 0, %s121
      %s122 = sphi 0, %s119
      %s123 = sphi 0, %s122
      %s139 = sphi 0, %s123
    $region4: #{tpu_custom_call.1} parent=1 // loop_header_branch
      %18 = sbr.rel (%p16) target = $region8
    $region5: #{tpu_custom_call.1} parent=1 // loop_body
      %s20 = ssub.s32 %s15, 1
      %s21 = ssub.s32 %s15, 2
      %s28 = sadd.s32 1, %s23
      %p29 = scmp.ge.s32.totalorder %s28, 1
      %s30 = scalar_select %p29, 0, %s28
      %s31 = sadd.s32 1, %s22
      %s32 = scalar_select %p29, %s31, %s22
      %p33 = scmp.ge.s32.totalorder %s32, 2
      %s34 = scalar_select %p33, 0, %s32
      %s35 = ssub.s32 %s22, %s34
      %p36 = scmp.eq.s32.totalorder %s35, 0
      %s38 = sadd.s32 %s37, 1
      %s39 = scalar_select %p36, %s37, %s38
      %p42 = pneg %p36
      %p43 = scmp.eq.s32.totalorder %s15, 1
      %p44 = por %p42, %p43
      %p45 = scmp.ne.s32.totalorder %s37, %s40
      %p46 = scmp.eq.s32.totalorder %s15, 0
      %p47 = por %p45, %p46
      %p48 = scmp.ne.s32.totalorder %s37, %s40
      %p49 = scmp.eq.s32.totalorder %s20, 1
      %p50 = por %p48, %p49
      %p51 = scmp.ne.s32.totalorder %s40, %s41
      %p52 = scmp.eq.s32.totalorder %s20, 0
      %p53 = por %p51, %p52
      %p54 = scmp.ne.s32.totalorder %s40, %s41
      %p55 = scmp.eq.s32.totalorder %s21, 1
      %p56 = por %p54, %p55
      %p58 = scmp.ne.s32.totalorder %s41, %s57
      %p59 = scmp.eq.s32.totalorder %s21, 0
      %p60 = por %p58, %p59
      %s61 = ssub.s32 %s22, %s34
      %p62 = scmp.eq.s32.totalorder %s61, 0
      %s64 = sadd.s32 %s63, 1
      %s65 = scalar_select %p62, %s63, %s64
      %p68 = pneg %p62
      %p69 = scmp.eq.s32.totalorder %s15, 1
      %p70 = por %p68, %p69
      %p71 = scmp.ne.s32.totalorder %s63, %s66
      %p72 = scmp.eq.s32.totalorder %s15, 0
      %p73 = por %p71, %p72
      %p74 = scmp.ne.s32.totalorder %s63, %s66
      %p75 = scmp.eq.s32.totalorder %s20, 1
      %p76 = por %p74, %p75
      %p77 = scmp.ne.s32.totalorder %s66, %s67
      %p78 = scmp.eq.s32.totalorder %s20, 0
      %p79 = por %p77, %p78
      %p80 = scmp.ne.s32.totalorder %s66, %s67
      %p81 = scmp.eq.s32.totalorder %s21, 1
      %p82 = por %p80, %p81
      %p84 = scmp.ne.s32.totalorder %s67, %s83
      %p85 = scmp.eq.s32.totalorder %s21, 0
      %p86 = por %p84, %p85
      %s87 = ssub.s32 %s22, %s34
      %s88 = ssub.s32 %s23, %s30
      %s89 = sor.u32 %s87, %s88
      %p90 = scmp.eq.s32.totalorder %s89, 0
      %s92 = sadd.s32 %s91, 1
      %s93 = scalar_select %p90, %s91, %s92
      %p96 = pneg %p90
      %p97 = scmp.eq.s32.totalorder %s15, 1
      %p98 = por %p96, %p97
      %p99 = scmp.ne.s32.totalorder %s91, %s94
      %p100 = scmp.eq.s32.totalorder %s15, 0
      %p101 = por %p99, %p100
      %p102 = scmp.ne.s32.totalorder %s91, %s94
      %p103 = scmp.eq.s32.totalorder %s20, 1
      %p104 = por %p102, %p103
      %p105 = scmp.ne.s32.totalorder %s94, %s95
      %p106 = scmp.eq.s32.totalorder %s20, 0
      %p107 = por %p105, %p106
      %p108 = scmp.ne.s32.totalorder %s94, %s95
      %p109 = scmp.eq.s32.totalorder %s21, 1
      %p110 = por %p108, %p109
      %p112 = scmp.ne.s32.totalorder %s95, %s111
      %p113 = scmp.eq.s32.totalorder %s21, 0
      %p114 = por %p112, %p113
      %s115 = ssub.s32 %s22, %s34
      %s116 = ssub.s32 %s23, %s30
      %s117 = sor.u32 %s115, %s116
      %p118 = scmp.eq.s32.totalorder %s117, 0
      %s120 = sadd.s32 %s119, 1
      %s121 = scalar_select %p118, %s119, %s120
      %p124 = pneg %p118
      %p125 = scmp.eq.s32.totalorder %s15, 1
      %p126 = por %p124, %p125
      %p127 = scmp.ne.s32.totalorder %s119, %s122
      %p128 = scmp.eq.s32.totalorder %s15, 0
      %p129 = por %p127, %p128
      %p130 = scmp.ne.s32.totalorder %s119, %s122
      %p131 = scmp.eq.s32.totalorder %s20, 1
      %p132 = por %p130, %p131
      %p133 = scmp.ne.s32.totalorder %s122, %s123
      %p134 = scmp.eq.s32.totalorder %s20, 0
      %p135 = por %p133, %p134
      %p136 = scmp.ne.s32.totalorder %s122, %s123
      %p137 = scmp.eq.s32.totalorder %s21, 1
      %p138 = por %p136, %p137
      %p140 = scmp.ne.s32.totalorder %s123, %s139
      %p141 = scmp.eq.s32.totalorder %s21, 0
      %p142 = por %p140, %p141
      %p143 = scmp.le.s32.totalorder 1, %s15
      %p144 = scmp.lt.s32.totalorder %s15, 3
      %p145 = pnand %p143, %p144
      %p146 = pneg %p145
      // Predicated region
      $region9: #{tpu_custom_call.1} parent=5 // pred_check
        _
      $region10: #{tpu_custom_call.1} parent=5 // pred_check_branch
        %148 = sbr.rel (%p145) target = $region12
      $region11: #{tpu_custom_call.1} parent=5 // pred_region
        %s149 = ssub.s32 %s15, 1
      $region12: #{tpu_custom_call.1} parent=5 // pred_fallthru
        _
      %p150 = scmp.lt.s32.totalorder %s15, 2
      // Predicated region
      $region13: #{tpu_custom_call.1} parent=5 // pred_check
        %p151 = pneg %p150
      $region14: #{tpu_custom_call.1} parent=5 // pred_check_branch
        %153 = sbr.rel (%p151) target = $region16
      $region15: #{tpu_custom_call.1} parent=5 // pred_region
        // Predicated region
        $region17: #{tpu_custom_call.1} parent=15 // pred_check
          %p154 = pneg %p47
        $region18: #{tpu_custom_call.1} parent=15 // pred_check_branch
          %156 = sbr.rel (%p154) target = $region20
        $region19: #{tpu_custom_call.1} parent=15 // pred_region
          %p157 = scmp.lt.s32.totalorder %s22, 1
          %s158 = scalar_select %p157, %s22, 1
          %s159 = smul.addr %s158, 2
          %s160 = smul.addr %s159, 8
          %s161 = scalar_lea.vmem %s0, %s160
        $region20: #{tpu_custom_call.1} parent=15 // pred_fallthru
          _
        // Predicated region
        $region21: #{tpu_custom_call.1} parent=15 // pred_check
          %p162 = pneg %p73
        $region22: #{tpu_custom_call.1} parent=15 // pred_check_branch
          %164 = sbr.rel (%p162) target = $region24
        $region23: #{tpu_custom_call.1} parent=15 // pred_region
          %p165 = scmp.lt.s32.totalorder %s22, 1
          %s166 = scalar_select %p165, %s22, 1
          %s167 = scalar_lea.vmem %s1, %s166
        $region24: #{tpu_custom_call.1} parent=15 // pred_fallthru
          _
        // Predicated region
        $region25: #{tpu_custom_call.1} parent=15 // pred_check
          %p168 = pneg %p101
        $region26: #{tpu_custom_call.1} parent=15 // pred_check_branch
          %170 = sbr.rel (%p168) target = $region28
        $region27: #{tpu_custom_call.1} parent=15 // pred_region
          %s171 = sand.u32 %s91, 1
          %s172 = scalar_lea.sflag [#allocation3], %s171
          %s173 = sand.u32 %s91, 1
          %s174 = smul.addr %s173, 64
          %s175 = scalar_lea.vmem [#allocation2], %s174
          %s176 = smul.u32 4, %s23
          %s178 = ssub.s32 1024, 1024
          %179 = vsyncadd %s172, %s178
          %s180 = smul.addr %s176, 2
          %s181 = smul.addr %s22, 8
          %s182 = sadd.s32 %s180, %s181
          %s183 = smul.addr %s182, 128
          %s184 = scalar_lea.hbm %s2, %s183
          %s185 = sshll.u32 %s175, 4
          %s186 = int_to_ptr.vmem [resolvable:$true] %s185
          %191 = dma.hbm_to_vmem [thread:$0]  %s184, 1024, %s186, %s172, 128, 128, 8
        $region28: #{tpu_custom_call.1} parent=15 // pred_fallthru
          _
      $region16: #{tpu_custom_call.1} parent=5 // pred_fallthru
        _
      %p192 = scmp.le.s32.totalorder 1, %s15
      %p193 = scmp.lt.s32.totalorder %s15, 3
      %p194 = pnand %p192, %p193
      %p195 = pneg %p194
      // Predicated region
      $region29: #{tpu_custom_call.1} parent=5 // pred_check
        _
      $region30: #{tpu_custom_call.1} parent=5 // pred_check_branch
        %197 = sbr.rel (%p194) target = $region32
      $region31: #{tpu_custom_call.1} parent=5 // pred_region
        %s198 = ssub.s32 %s15, 1
        %s199 = sand.u32 %s94, 1
        %s200 = scalar_lea.sflag [#allocation3], %s199
        %s201 = sand.u32 %s94, 1
        %s202 = smul.addr %s201, 64
        %s203 = scalar_lea.vmem [#allocation2], %s202
        // Predicated region
        $region33: #{tpu_custom_call.1} parent=31 // pred_check
          %p204 = pneg %p107
        $region34: #{tpu_custom_call.1} parent=31 // pred_check_branch
          %206 = sbr.rel (%p204) target = $region36
        $region35: #{tpu_custom_call.1} parent=31 // pred_region
          %207 = dma.done %s200, 1024
        $region36: #{tpu_custom_call.1} parent=31 // pred_fallthru
          _
        %p208 = scmp.lt.s32.totalorder %s24, 1
        %s209 = scalar_select %p208, %s24, 1
        %s210 = smul.addr %s209, 2
        %s211 = smul.addr %s210, 8
        %s212 = scalar_lea.vmem %s0, %s211
        %p213 = pneg %p53
        %p214 = pneg %p50
        %p215 = scmp.lt.s32.totalorder %s24, 1
        %s216 = scalar_select %p215, %s24, 1
        %s217 = scalar_lea.vmem %s1, %s216
        %p218 = pneg %p79
        %p219 = pneg %p76
        %s220 = sand.u32 %s94, 1
        %s221 = scalar_lea.sflag [#allocation3], %s220
        %s222 = sand.u32 %s94, 1
        %s223 = smul.addr %s222, 64
        %s224 = scalar_lea.vmem [#allocation2], %s223
        %p225 = pneg %p107
        %p226 = pneg %p104
        %p227 = pneg %p135
        %p228 = pneg %p132
        %s229 = sand.u32 %s122, 1
        %s230 = scalar_lea.sflag [#allocation4], %s229
        %s231 = sand.u32 %s122, 1
        %s232 = smul.addr %s231, 64
        %s233 = scalar_lea.vmem [#allocation5], %s232
        %p234 = scmp.lt.s32.totalorder %s24, 1
        %s235 = scalar_select %p234, %s24, 1
        %s236 = smul.addr %s235, 2
        %s237 = smul.addr %s236, 8
        %s238 = scalar_lea.vmem %s0, %s237
        %p239 = scmp.lt.s32.totalorder %s24, 1
        %s240 = scalar_select %p239, %s24, 1
        %s241 = scalar_lea.vmem %s1, %s240
        %s242 = smul.u32 4, %s25
        %s243 = smul.u32 4, %s25
        %v244 = vld [vmem:[%s238] sm:$0xff]
        %v245 = vld [vmem:[%s238 + $0x8] sm:$0xff]
        %v246 = vld [vmem:[%s241] sm:$0x1]
        %247 = vset.pattern.permute.xlu0 0
        %248 = vperm.xlu0 %247, %v244
        %v249 = vpop.permute.xlu0 %248
        %250 = vset.pattern.permute.xlu0 0
        %251 = vperm.xlu0 %250, %v245
        %v252 = vpop.permute.xlu0 %251
        %v253 = vlaneseq
        %v254 = vand.u32 %v253, 127
        %vm255 = vcmp.eq.s32.totalorder %v249, %v254
        %vm256 = vcmp.eq.s32.totalorder %v252, %v254
        %v257 = vsel %vm255, 1, 0
        %v258 = vsel %vm256, 1, 0
        %v259 = vcvt.s32.f32 %v257
        %v260 = vcvt.s32.f32 %v258
        %v261 = vlaneseq
        %v262 = vshrl.u32 %v261, 7
        %v263 = vadd.s32 %v262, 8
        %v264 = vlaneseq
        %v265 = vshrl.u32 %v264, 7
        %v266 = vsub.s32 0, %v265
        %v267 = vrot.slane %v246, %v266
        %vm268 = vcmp.eq.s32.totalorder %v262, %v267
        %vm269 = vcmp.eq.s32.totalorder %v263, %v267
        %v270 = vsel %vm268, 1, 0
        %v271 = vsel %vm269, 1, 0
        %v272 = vcvt.s32.f32 %v270
        %v273 = vcvt.s32.f32 %v271
        %vm274 = vcmp.ge.s32.totalorder %v244, 0
        %vm275 = vcmp.ge.s32.totalorder %v245, 0
        %vm276 = vcmp.ge.s32.totalorder %v246, 0
        %v277 = vsel %vm274, 1, 0
        %v278 = vsel %vm275, 1, 0
        %279 = vset.pattern.permute.xlu0 0
        %280 = vperm.xlu0 %279, %v277
        %v281 = vpop.permute.xlu0 %280
        %282 = vset.pattern.permute.xlu0 0
        %283 = vperm.xlu0 %282, %v278
        %v284 = vpop.permute.xlu0 %283
        %vm285 = vcmp.eq.s32.totalorder %v281, 1
        %vm286 = vcmp.eq.s32.totalorder %v284, 1
        %v287 = vsel %vm276, 1, 0
        %v288 = vlaneseq
        %v289 = vshrl.u32 %v288, 7
        %v290 = vsub.s32 0, %v289
        %v291 = vrot.slane %v287, %v290
        %vm292 = vcmp.eq.s32.totalorder %v291, 1
        %vm293 = vmand %vm285, %vm292
        %vm294 = vmand %vm286, %vm292
        %v295 = vld [vmem:[%s203] sm:$0xff]
        %v296 = vld [vmem:[%s203 + $0x8] sm:$0xff]
        %vm297 = vcmask 130048
        %v299 = vsel %vm297, %v259, 0
        %v302 = vsel %vm297, %v260, 0
        %304 = vmatprep.subr.mxu0 0.0
        %305 = vmatpush1.msra.mxu0 0.0
        %306 = vmatprep.subr.mxu0 0.0
        %307 = vmatpush1.msra.mxu0 0.0
        %308 = vmatprep.subr.mxu0 0.0
        %309 = vmatpush1.msra.mxu0 0.0
        %310 = vmatprep.subr.mxu0 0.0
        %311 = vmatpush1.msra.mxu0 0.0
        %312 = vmatprep.subr.mxu0 0.0
        %313 = vmatpush1.msra.mxu0 0.0
        %314 = vmatprep.subr.mxu0 0.0
        %315 = vmatpush1.msra.mxu0 0.0
        %316 = vmatprep.subr.mxu0 0.0
        %317 = vmatpush1.msra.mxu0 0.0
        %318 = vmatprep.subr.mxu0 0.0
        %319 = vmatpush1.msra.mxu0 0.0
        %320 = vmatprep.subr.mxu0 0.0
        %321 = vmatpush1.msra.mxu0 0.0
        %322 = vmatprep.subr.mxu0 0.0
        %323 = vmatpush1.msra.mxu0 0.0
        %324 = vmatprep.subr.mxu0 0.0
        %325 = vmatpush1.msra.mxu0 0.0
        %326 = vmatprep.subr.mxu0 0.0
        %327 = vmatpush1.msra.mxu0 0.0
        %328 = vmatprep.subr.mxu0 0.0
        %329 = vmatpush1.msra.mxu0 0.0
        %330 = vmatprep.subr.mxu0 0.0
        %331 = vmatpush1.msra.mxu0 0.0
        %332 = vmatprep.subr.mxu0 0.0
        %333 = vmatpush1.msra.mxu0 %v296
        %334 = vmatprep.subr.mxu0 0.0
        %335 = vmatpush1.msra.mxu0 %v295
        %336 = vmatprep.subr.mxu0 0.0
        %337 = vmatpush2.msra.mxu0 0.0
        %338 = vmatprep.subr.mxu0 0.0
        %339 = vmatpush2.msra.mxu0 0.0
        %340 = vmatprep.subr.mxu0 0.0
        %341 = vmatpush2.msra.mxu0 0.0
        %342 = vmatprep.subr.mxu0 0.0
        %343 = vmatpush2.msra.mxu0 0.0
        %344 = vmatprep.subr.mxu0 0.0
        %345 = vmatpush2.msra.mxu0 0.0
        %346 = vmatprep.subr.mxu0 0.0
        %347 = vmatpush2.msra.mxu0 0.0
        %348 = vmatprep.subr.mxu0 0.0
        %349 = vmatpush2.msra.mxu0 0.0
        %350 = vmatprep.subr.mxu0 0.0
        %351 = vmatpush2.msra.mxu0 0.0
        %352 = vmatprep.subr.mxu0 0.0
        %353 = vmatpush2.msra.mxu0 0.0
        %354 = vmatprep.subr.mxu0 0.0
        %355 = vmatpush2.msra.mxu0 0.0
        %356 = vmatprep.subr.mxu0 0.0
        %357 = vmatpush2.msra.mxu0 0.0
        %358 = vmatprep.subr.mxu0 0.0
        %359 = vmatpush2.msra.mxu0 0.0
        %360 = vmatprep.subr.mxu0 0.0
        %361 = vmatpush2.msra.mxu0 0.0
        %362 = vmatprep.subr.mxu0 0.0
        %363 = vmatpush2.msra.mxu0 0.0
        %364 = vmatprep.subr.mxu0 0.0
        %365 = vmatpush2.msra.mxu0 0.0
        %366 = vmatprep.subr.mxu0 0.0
        %367 = vmatpush2.msra.mxu0 0.0
        %368 = vmatprep.mubr.f32.mxu0 0.0
        %369 = vmatmul.mubr.f32.gmra.mxu0 %v299
        %v370 = vpop.f32.mrf.mxu0
        %v371 = vadd.f32 0.0, %v370
        %v372 = vpop.f32.mrf.mxu0
        %373 = vmatprep.mubr.f32.mxu0 0.0
        %374 = vmatmul.mubr.f32.gmra.mxu0 %v302
        %v375 = vpop.f32.mrf.mxu0
        %v376 = vadd.f32 0.0, %v375
        %v377 = vpop.f32.mrf.mxu0
        %378 = vdwg.mxu0
        %v380 = vsel %vm297, %v371, 0
        %v383 = vsel %vm297, %v376, 0
        %385 = vmatprep.subr.mxu0 0.0
        %386 = vmatpush1.msra.mxu0 0.0
        %387 = vmatprep.subr.mxu0 0.0
        %388 = vmatpush1.msra.mxu0 0.0
        %389 = vmatprep.subr.mxu0 0.0
        %390 = vmatpush1.msra.mxu0 0.0
        %391 = vmatprep.subr.mxu0 0.0
        %392 = vmatpush1.msra.mxu0 0.0
        %393 = vmatprep.subr.mxu0 0.0
        %394 = vmatpush1.msra.mxu0 0.0
        %395 = vmatprep.subr.mxu0 0.0
        %396 = vmatpush1.msra.mxu0 0.0
        %397 = vmatprep.subr.mxu0 0.0
        %398 = vmatpush1.msra.mxu0 0.0
        %399 = vmatprep.subr.mxu0 0.0
        %400 = vmatpush1.msra.mxu0 0.0
        %401 = vmatprep.subr.mxu0 0.0
        %402 = vmatpush1.msra.mxu0 0.0
        %403 = vmatprep.subr.mxu0 0.0
        %404 = vmatpush1.msra.mxu0 0.0
        %405 = vmatprep.subr.mxu0 0.0
        %406 = vmatpush1.msra.mxu0 0.0
        %407 = vmatprep.subr.mxu0 0.0
        %408 = vmatpush1.msra.mxu0 0.0
        %409 = vmatprep.subr.mxu0 0.0
        %410 = vmatpush1.msra.mxu0 0.0
        %411 = vmatprep.subr.mxu0 0.0
        %412 = vmatpush1.msra.mxu0 0.0
        %413 = vmatprep.subr.mxu0 0.0
        %414 = vmatpush1.msra.mxu0 %v273
        %415 = vmatprep.subr.mxu0 0.0
        %416 = vmatpush1.msra.mxu0 %v272
        %417 = vmatprep.subr.mxu0 0.0
        %418 = vmatpush2.msra.mxu0 0.0
        %419 = vmatprep.subr.mxu0 0.0
        %420 = vmatpush2.msra.mxu0 0.0
        %421 = vmatprep.subr.mxu0 0.0
        %422 = vmatpush2.msra.mxu0 0.0
        %423 = vmatprep.subr.mxu0 0.0
        %424 = vmatpush2.msra.mxu0 0.0
        %425 = vmatprep.subr.mxu0 0.0
        %426 = vmatpush2.msra.mxu0 0.0
        %427 = vmatprep.subr.mxu0 0.0
        %428 = vmatpush2.msra.mxu0 0.0
        %429 = vmatprep.subr.mxu0 0.0
        %430 = vmatpush2.msra.mxu0 0.0
        %431 = vmatprep.subr.mxu0 0.0
        %432 = vmatpush2.msra.mxu0 0.0
        %433 = vmatprep.subr.mxu0 0.0
        %434 = vmatpush2.msra.mxu0 0.0
        %435 = vmatprep.subr.mxu0 0.0
        %436 = vmatpush2.msra.mxu0 0.0
        %437 = vmatprep.subr.mxu0 0.0
        %438 = vmatpush2.msra.mxu0 0.0
        %439 = vmatprep.subr.mxu0 0.0
        %440 = vmatpush2.msra.mxu0 0.0
        %441 = vmatprep.subr.mxu0 0.0
        %442 = vmatpush2.msra.mxu0 0.0
        %443 = vmatprep.subr.mxu0 0.0
        %444 = vmatpush2.msra.mxu0 0.0
        %445 = vmatprep.subr.mxu0 0.0
        %446 = vmatpush2.msra.mxu0 0.0
        %447 = vmatprep.subr.mxu0 0.0
        %448 = vmatpush2.msra.mxu0 0.0
        %449 = vmatprep.mubr.f32.mxu0 0.0
        %450 = vmatmul.mubr.f32.gmra.mxu0 %v380
        %v451 = vpop.f32.mrf.mxu0
        %v452 = vadd.f32 0.0, %v451
        %v453 = vpop.f32.mrf.mxu0
        %454 = vmatprep.mubr.f32.mxu0 0.0
        %455 = vmatmul.mubr.f32.gmra.mxu0 %v383
        %v456 = vpop.f32.mrf.mxu0
        %v457 = vadd.f32 0.0, %v456
        %v458 = vpop.f32.mrf.mxu0
        %459 = vdwg.mxu0
        %v460 = vsel %vm293, %v452, 0.0
        %v461 = vsel %vm294, %v457, 0.0
        %462 = vst.msk [vmem:[%s233] sm:$0xff] %vm297, %v460
        %463 = vst.msk [vmem:[%s233 + $0x8] sm:$0xff] %vm297, %v461
        %s464 = scalar_lea.vmem %s203, 16 [#allocation2]
        %v465 = vld [vmem:[%s464] sm:$0xff]
        %v466 = vld [vmem:[%s464 + $0x8] sm:$0xff]
        %467 = vmatprep.subr.mxu0 0.0
        %468 = vmatpush1.msra.mxu0 0.0
        %469 = vmatprep.subr.mxu0 0.0
        %470 = vmatpush1.msra.mxu0 0.0
        %471 = vmatprep.subr.mxu0 0.0
        %472 = vmatpush1.msra.mxu0 0.0
        %473 = vmatprep.subr.mxu0 0.0
        %474 = vmatpush1.msra.mxu0 0.0
        %475 = vmatprep.subr.mxu0 0.0
        %476 = vmatpush1.msra.mxu0 0.0
        %477 = vmatprep.subr.mxu0 0.0
        %478 = vmatpush1.msra.mxu0 0.0
        %479 = vmatprep.subr.mxu0 0.0
        %480 = vmatpush1.msra.mxu0 0.0
        %481 = vmatprep.subr.mxu0 0.0
        %482 = vmatpush1.msra.mxu0 0.0
        %483 = vmatprep.subr.mxu0 0.0
        %484 = vmatpush1.msra.mxu0 0.0
        %485 = vmatprep.subr.mxu0 0.0
        %486 = vmatpush1.msra.mxu0 0.0
        %487 = vmatprep.subr.mxu0 0.0
        %488 = vmatpush1.msra.mxu0 0.0
        %489 = vmatprep.subr.mxu0 0.0
        %490 = vmatpush1.msra.mxu0 0.0
        %491 = vmatprep.subr.mxu0 0.0
        %492 = vmatpush1.msra.mxu0 0.0
        %493 = vmatprep.subr.mxu0 0.0
        %494 = vmatpush1.msra.mxu0 0.0
        %495 = vmatprep.subr.mxu0 0.0
        %496 = vmatpush1.msra.mxu0 %v466
        %497 = vmatprep.subr.mxu0 0.0
        %498 = vmatpush1.msra.mxu0 %v465
        %499 = vmatprep.subr.mxu0 0.0
        %500 = vmatpush2.msra.mxu0 0.0
        %501 = vmatprep.subr.mxu0 0.0
        %502 = vmatpush2.msra.mxu0 0.0
        %503 = vmatprep.subr.mxu0 0.0
        %504 = vmatpush2.msra.mxu0 0.0
        %505 = vmatprep.subr.mxu0 0.0
        %506 = vmatpush2.msra.mxu0 0.0
        %507 = vmatprep.subr.mxu0 0.0
        %508 = vmatpush2.msra.mxu0 0.0
        %509 = vmatprep.subr.mxu0 0.0
        %510 = vmatpush2.msra.mxu0 0.0
        %511 = vmatprep.subr.mxu0 0.0
        %512 = vmatpush2.msra.mxu0 0.0
        %513 = vmatprep.subr.mxu0 0.0
        %514 = vmatpush2.msra.mxu0 0.0
        %515 = vmatprep.subr.mxu0 0.0
        %516 = vmatpush2.msra.mxu0 0.0
        %517 = vmatprep.subr.mxu0 0.0
        %518 = vmatpush2.msra.mxu0 0.0
        %519 = vmatprep.subr.mxu0 0.0
        %520 = vmatpush2.msra.mxu0 0.0
        %521 = vmatprep.subr.mxu0 0.0
        %522 = vmatpush2.msra.mxu0 0.0
        %523 = vmatprep.subr.mxu0 0.0
        %524 = vmatpush2.msra.mxu0 0.0
        %525 = vmatprep.subr.mxu0 0.0
        %526 = vmatpush2.msra.mxu0 0.0
        %527 = vmatprep.subr.mxu0 0.0
        %528 = vmatpush2.msra.mxu0 0.0
        %529 = vmatprep.subr.mxu0 0.0
        %530 = vmatpush2.msra.mxu0 0.0
        %531 = vmatprep.mubr.f32.mxu0 0.0
        %532 = vmatmul.mubr.f32.gmra.mxu0 %v299
        %v533 = vpop.f32.mrf.mxu0
        %v534 = vadd.f32 0.0, %v533
        %v535 = vpop.f32.mrf.mxu0
        %536 = vmatprep.mubr.f32.mxu0 0.0
        %537 = vmatmul.mubr.f32.gmra.mxu0 %v302
        %v538 = vpop.f32.mrf.mxu0
        %v539 = vadd.f32 0.0, %v538
        %v540 = vpop.f32.mrf.mxu0
        %541 = vdwg.mxu0
        %v543 = vsel %vm297, %v534, 0
        %v546 = vsel %vm297, %v539, 0
        %548 = vmatprep.subr.mxu0 0.0
        %549 = vmatpush1.msra.mxu0 0.0
        %550 = vmatprep.subr.mxu0 0.0
        %551 = vmatpush1.msra.mxu0 0.0
        %552 = vmatprep.subr.mxu0 0.0
        %553 = vmatpush1.msra.mxu0 0.0
        %554 = vmatprep.subr.mxu0 0.0
        %555 = vmatpush1.msra.mxu0 0.0
        %556 = vmatprep.subr.mxu0 0.0
        %557 = vmatpush1.msra.mxu0 0.0
        %558 = vmatprep.subr.mxu0 0.0
        %559 = vmatpush1.msra.mxu0 0.0
        %560 = vmatprep.subr.mxu0 0.0
        %561 = vmatpush1.msra.mxu0 0.0
        %562 = vmatprep.subr.mxu0 0.0
        %563 = vmatpush1.msra.mxu0 0.0
        %564 = vmatprep.subr.mxu0 0.0
        %565 = vmatpush1.msra.mxu0 0.0
        %566 = vmatprep.subr.mxu0 0.0
        %567 = vmatpush1.msra.mxu0 0.0
        %568 = vmatprep.subr.mxu0 0.0
        %569 = vmatpush1.msra.mxu0 0.0
        %570 = vmatprep.subr.mxu0 0.0
        %571 = vmatpush1.msra.mxu0 0.0
        %572 = vmatprep.subr.mxu0 0.0
        %573 = vmatpush1.msra.mxu0 0.0
        %574 = vmatprep.subr.mxu0 0.0
        %575 = vmatpush1.msra.mxu0 0.0
        %576 = vmatprep.subr.mxu0 0.0
        %577 = vmatpush1.msra.mxu0 %v273
        %578 = vmatprep.subr.mxu0 0.0
        %579 = vmatpush1.msra.mxu0 %v272
        %580 = vmatprep.subr.mxu0 0.0
        %581 = vmatpush2.msra.mxu0 0.0
        %582 = vmatprep.subr.mxu0 0.0
        %583 = vmatpush2.msra.mxu0 0.0
        %584 = vmatprep.subr.mxu0 0.0
        %585 = vmatpush2.msra.mxu0 0.0
        %586 = vmatprep.subr.mxu0 0.0
        %587 = vmatpush2.msra.mxu0 0.0
        %588 = vmatprep.subr.mxu0 0.0
        %589 = vmatpush2.msra.mxu0 0.0
        %590 = vmatprep.subr.mxu0 0.0
        %591 = vmatpush2.msra.mxu0 0.0
        %592 = vmatprep.subr.mxu0 0.0
        %593 = vmatpush2.msra.mxu0 0.0
        %594 = vmatprep.subr.mxu0 0.0
        %595 = vmatpush2.msra.mxu0 0.0
        %596 = vmatprep.subr.mxu0 0.0
        %597 = vmatpush2.msra.mxu0 0.0
        %598 = vmatprep.subr.mxu0 0.0
        %599 = vmatpush2.msra.mxu0 0.0
        %600 = vmatprep.subr.mxu0 0.0
        %601 = vmatpush2.msra.mxu0 0.0
        %602 = vmatprep.subr.mxu0 0.0
        %603 = vmatpush2.msra.mxu0 0.0
        %604 = vmatprep.subr.mxu0 0.0
        %605 = vmatpush2.msra.mxu0 0.0
        %606 = vmatprep.subr.mxu0 0.0
        %607 = vmatpush2.msra.mxu0 0.0
        %608 = vmatprep.subr.mxu0 0.0
        %609 = vmatpush2.msra.mxu0 0.0
        %610 = vmatprep.subr.mxu0 0.0
        %611 = vmatpush2.msra.mxu0 0.0
        %612 = vmatprep.mubr.f32.mxu0 0.0
        %613 = vmatmul.mubr.f32.gmra.mxu0 %v543
        %v614 = vpop.f32.mrf.mxu0
        %v615 = vadd.f32 0.0, %v614
        %v616 = vpop.f32.mrf.mxu0
        %617 = vmatprep.mubr.f32.mxu0 0.0
        %618 = vmatmul.mubr.f32.gmra.mxu0 %v546
        %v619 = vpop.f32.mrf.mxu0
        %v620 = vadd.f32 0.0, %v619
        %v621 = vpop.f32.mrf.mxu0
        %622 = vdwg.mxu0
        %v623 = vsel %vm293, %v615, 0.0
        %v624 = vsel %vm294, %v620, 0.0
        %s625 = scalar_lea.vmem %s233, 16 [#allocation5]
        %626 = vst.msk [vmem:[%s625] sm:$0xff] %vm297, %v623
        %627 = vst.msk [vmem:[%s625 + $0x8] sm:$0xff] %vm297, %v624
        %s628 = scalar_lea.vmem %s203, 32 [#allocation2]
        %v629 = vld [vmem:[%s628] sm:$0xff]
        %v630 = vld [vmem:[%s628 + $0x8] sm:$0xff]
        %631 = vmatprep.subr.mxu0 0.0
        %632 = vmatpush1.msra.mxu0 0.0
        %633 = vmatprep.subr.mxu0 0.0
        %634 = vmatpush1.msra.mxu0 0.0
        %635 = vmatprep.subr.mxu0 0.0
        %636 = vmatpush1.msra.mxu0 0.0
        %637 = vmatprep.subr.mxu0 0.0
        %638 = vmatpush1.msra.mxu0 0.0
        %639 = vmatprep.subr.mxu0 0.0
        %640 = vmatpush1.msra.mxu0 0.0
        %641 = vmatprep.subr.mxu0 0.0
        %642 = vmatpush1.msra.mxu0 0.0
        %643 = vmatprep.subr.mxu0 0.0
        %644 = vmatpush1.msra.mxu0 0.0
        %645 = vmatprep.subr.mxu0 0.0
        %646 = vmatpush1.msra.mxu0 0.0
        %647 = vmatprep.subr.mxu0 0.0
        %648 = vmatpush1.msra.mxu0 0.0
        %649 = vmatprep.subr.mxu0 0.0
        %650 = vmatpush1.msra.mxu0 0.0
        %651 = vmatprep.subr.mxu0 0.0
        %652 = vmatpush1.msra.mxu0 0.0
        %653 = vmatprep.subr.mxu0 0.0
        %654 = vmatpush1.msra.mxu0 0.0
        %655 = vmatprep.subr.mxu0 0.0
        %656 = vmatpush1.msra.mxu0 0.0
        %657 = vmatprep.subr.mxu0 0.0
        %658 = vmatpush1.msra.mxu0 0.0
        %659 = vmatprep.subr.mxu0 0.0
        %660 = vmatpush1.msra.mxu0 %v630
        %661 = vmatprep.subr.mxu0 0.0
        %662 = vmatpush1.msra.mxu0 %v629
        %663 = vmatprep.subr.mxu0 0.0
        %664 = vmatpush2.msra.mxu0 0.0
        %665 = vmatprep.subr.mxu0 0.0
        %666 = vmatpush2.msra.mxu0 0.0
        %667 = vmatprep.subr.mxu0 0.0
        %668 = vmatpush2.msra.mxu0 0.0
        %669 = vmatprep.subr.mxu0 0.0
        %670 = vmatpush2.msra.mxu0 0.0
        %671 = vmatprep.subr.mxu0 0.0
        %672 = vmatpush2.msra.mxu0 0.0
        %673 = vmatprep.subr.mxu0 0.0
        %674 = vmatpush2.msra.mxu0 0.0
        %675 = vmatprep.subr.mxu0 0.0
        %676 = vmatpush2.msra.mxu0 0.0
        %677 = vmatprep.subr.mxu0 0.0
        %678 = vmatpush2.msra.mxu0 0.0
        %679 = vmatprep.subr.mxu0 0.0
        %680 = vmatpush2.msra.mxu0 0.0
        %681 = vmatprep.subr.mxu0 0.0
        %682 = vmatpush2.msra.mxu0 0.0
        %683 = vmatprep.subr.mxu0 0.0
        %684 = vmatpush2.msra.mxu0 0.0
        %685 = vmatprep.subr.mxu0 0.0
        %686 = vmatpush2.msra.mxu0 0.0
        %687 = vmatprep.subr.mxu0 0.0
        %688 = vmatpush2.msra.mxu0 0.0
        %689 = vmatprep.subr.mxu0 0.0
        %690 = vmatpush2.msra.mxu0 0.0
        %691 = vmatprep.subr.mxu0 0.0
        %692 = vmatpush2.msra.mxu0 0.0
        %693 = vmatprep.subr.mxu0 0.0
        %694 = vmatpush2.msra.mxu0 0.0
        %695 = vmatprep.mubr.f32.mxu0 0.0
        %696 = vmatmul.mubr.f32.gmra.mxu0 %v299
        %v697 = vpop.f32.mrf.mxu0
        %v698 = vadd.f32 0.0, %v697
        %v699 = vpop.f32.mrf.mxu0
        %700 = vmatprep.mubr.f32.mxu0 0.0
        %701 = vmatmul.mubr.f32.gmra.mxu0 %v302
        %v702 = vpop.f32.mrf.mxu0
        %v703 = vadd.f32 0.0, %v702
        %v704 = vpop.f32.mrf.mxu0
        %705 = vdwg.mxu0
        %v707 = vsel %vm297, %v698, 0
        %v710 = vsel %vm297, %v703, 0
        %712 = vmatprep.subr.mxu0 0.0
        %713 = vmatpush1.msra.mxu0 0.0
        %714 = vmatprep.subr.mxu0 0.0
        %715 = vmatpush1.msra.mxu0 0.0
        %716 = vmatprep.subr.mxu0 0.0
        %717 = vmatpush1.msra.mxu0 0.0
        %718 = vmatprep.subr.mxu0 0.0
        %719 = vmatpush1.msra.mxu0 0.0
        %720 = vmatprep.subr.mxu0 0.0
        %721 = vmatpush1.msra.mxu0 0.0
        %722 = vmatprep.subr.mxu0 0.0
        %723 = vmatpush1.msra.mxu0 0.0
        %724 = vmatprep.subr.mxu0 0.0
        %725 = vmatpush1.msra.mxu0 0.0
        %726 = vmatprep.subr.mxu0 0.0
        %727 = vmatpush1.msra.mxu0 0.0
        %728 = vmatprep.subr.mxu0 0.0
        %729 = vmatpush1.msra.mxu0 0.0
        %730 = vmatprep.subr.mxu0 0.0
        %731 = vmatpush1.msra.mxu0 0.0
        %732 = vmatprep.subr.mxu0 0.0
        %733 = vmatpush1.msra.mxu0 0.0
        %734 = vmatprep.subr.mxu0 0.0
        %735 = vmatpush1.msra.mxu0 0.0
        %736 = vmatprep.subr.mxu0 0.0
        %737 = vmatpush1.msra.mxu0 0.0
        %738 = vmatprep.subr.mxu0 0.0
        %739 = vmatpush1.msra.mxu0 0.0
        %740 = vmatprep.subr.mxu0 0.0
        %741 = vmatpush1.msra.mxu0 %v273
        %742 = vmatprep.subr.mxu0 0.0
        %743 = vmatpush1.msra.mxu0 %v272
        %744 = vmatprep.subr.mxu0 0.0
        %745 = vmatpush2.msra.mxu0 0.0
        %746 = vmatprep.subr.mxu0 0.0
        %747 = vmatpush2.msra.mxu0 0.0
        %748 = vmatprep.subr.mxu0 0.0
        %749 = vmatpush2.msra.mxu0 0.0
        %750 = vmatprep.subr.mxu0 0.0
        %751 = vmatpush2.msra.mxu0 0.0
        %752 = vmatprep.subr.mxu0 0.0
        %753 = vmatpush2.msra.mxu0 0.0
        %754 = vmatprep.subr.mxu0 0.0
        %755 = vmatpush2.msra.mxu0 0.0
        %756 = vmatprep.subr.mxu0 0.0
        %757 = vmatpush2.msra.mxu0 0.0
        %758 = vmatprep.subr.mxu0 0.0
        %759 = vmatpush2.msra.mxu0 0.0
        %760 = vmatprep.subr.mxu0 0.0
        %761 = vmatpush2.msra.mxu0 0.0
        %762 = vmatprep.subr.mxu0 0.0
        %763 = vmatpush2.msra.mxu0 0.0
        %764 = vmatprep.subr.mxu0 0.0
        %765 = vmatpush2.msra.mxu0 0.0
        %766 = vmatprep.subr.mxu0 0.0
        %767 = vmatpush2.msra.mxu0 0.0
        %768 = vmatprep.subr.mxu0 0.0
        %769 = vmatpush2.msra.mxu0 0.0
        %770 = vmatprep.subr.mxu0 0.0
        %771 = vmatpush2.msra.mxu0 0.0
        %772 = vmatprep.subr.mxu0 0.0
        %773 = vmatpush2.msra.mxu0 0.0
        %774 = vmatprep.subr.mxu0 0.0
        %775 = vmatpush2.msra.mxu0 0.0
        %776 = vmatprep.mubr.f32.mxu0 0.0
        %777 = vmatmul.mubr.f32.gmra.mxu0 %v707
        %v778 = vpop.f32.mrf.mxu0
        %v779 = vadd.f32 0.0, %v778
        %v780 = vpop.f32.mrf.mxu0
        %781 = vmatprep.mubr.f32.mxu0 0.0
        %782 = vmatmul.mubr.f32.gmra.mxu0 %v710
        %v783 = vpop.f32.mrf.mxu0
        %v784 = vadd.f32 0.0, %v783
        %v785 = vpop.f32.mrf.mxu0
        %786 = vdwg.mxu0
        %v787 = vsel %vm293, %v779, 0.0
        %v788 = vsel %vm294, %v784, 0.0
        %s789 = scalar_lea.vmem %s233, 32 [#allocation5]
        %790 = vst.msk [vmem:[%s789] sm:$0xff] %vm297, %v787
        %791 = vst.msk [vmem:[%s789 + $0x8] sm:$0xff] %vm297, %v788
        %s792 = scalar_lea.vmem %s203, 48 [#allocation2]
        %v793 = vld [vmem:[%s792] sm:$0xff]
        %v794 = vld [vmem:[%s792 + $0x8] sm:$0xff]
        %795 = vmatprep.subr.mxu0 0.0
        %796 = vmatpush1.msra.mxu0 0.0
        %797 = vmatprep.subr.mxu0 0.0
        %798 = vmatpush1.msra.mxu0 0.0
        %799 = vmatprep.subr.mxu0 0.0
        %800 = vmatpush1.msra.mxu0 0.0
        %801 = vmatprep.subr.mxu0 0.0
        %802 = vmatpush1.msra.mxu0 0.0
        %803 = vmatprep.subr.mxu0 0.0
        %804 = vmatpush1.msra.mxu0 0.0
        %805 = vmatprep.subr.mxu0 0.0
        %806 = vmatpush1.msra.mxu0 0.0
        %807 = vmatprep.subr.mxu0 0.0
        %808 = vmatpush1.msra.mxu0 0.0
        %809 = vmatprep.subr.mxu0 0.0
        %810 = vmatpush1.msra.mxu0 0.0
        %811 = vmatprep.subr.mxu0 0.0
        %812 = vmatpush1.msra.mxu0 0.0
        %813 = vmatprep.subr.mxu0 0.0
        %814 = vmatpush1.msra.mxu0 0.0
        %815 = vmatprep.subr.mxu0 0.0
        %816 = vmatpush1.msra.mxu0 0.0
        %817 = vmatprep.subr.mxu0 0.0
        %818 = vmatpush1.msra.mxu0 0.0
        %819 = vmatprep.subr.mxu0 0.0
        %820 = vmatpush1.msra.mxu0 0.0
        %821 = vmatprep.subr.mxu0 0.0
        %822 = vmatpush1.msra.mxu0 0.0
        %823 = vmatprep.subr.mxu0 0.0
        %824 = vmatpush1.msra.mxu0 %v794
        %825 = vmatprep.subr.mxu0 0.0
        %826 = vmatpush1.msra.mxu0 %v793
        %827 = vmatprep.subr.mxu0 0.0
        %828 = vmatpush2.msra.mxu0 0.0
        %829 = vmatprep.subr.mxu0 0.0
        %830 = vmatpush2.msra.mxu0 0.0
        %831 = vmatprep.subr.mxu0 0.0
        %832 = vmatpush2.msra.mxu0 0.0
        %833 = vmatprep.subr.mxu0 0.0
        %834 = vmatpush2.msra.mxu0 0.0
        %835 = vmatprep.subr.mxu0 0.0
        %836 = vmatpush2.msra.mxu0 0.0
        %837 = vmatprep.subr.mxu0 0.0
        %838 = vmatpush2.msra.mxu0 0.0
        %839 = vmatprep.subr.mxu0 0.0
        %840 = vmatpush2.msra.mxu0 0.0
        %841 = vmatprep.subr.mxu0 0.0
        %842 = vmatpush2.msra.mxu0 0.0
        %843 = vmatprep.subr.mxu0 0.0
        %844 = vmatpush2.msra.mxu0 0.0
        %845 = vmatprep.subr.mxu0 0.0
        %846 = vmatpush2.msra.mxu0 0.0
        %847 = vmatprep.subr.mxu0 0.0
        %848 = vmatpush2.msra.mxu0 0.0
        %849 = vmatprep.subr.mxu0 0.0
        %850 = vmatpush2.msra.mxu0 0.0
        %851 = vmatprep.subr.mxu0 0.0
        %852 = vmatpush2.msra.mxu0 0.0
        %853 = vmatprep.subr.mxu0 0.0
        %854 = vmatpush2.msra.mxu0 0.0
        %855 = vmatprep.subr.mxu0 0.0
        %856 = vmatpush2.msra.mxu0 0.0
        %857 = vmatprep.subr.mxu0 0.0
        %858 = vmatpush2.msra.mxu0 0.0
        %859 = vmatprep.mubr.f32.mxu0 0.0
        %860 = vmatmul.mubr.f32.gmra.mxu0 %v299
        %v861 = vpop.f32.mrf.mxu0
        %v862 = vadd.f32 0.0, %v861
        %v863 = vpop.f32.mrf.mxu0
        %864 = vmatprep.mubr.f32.mxu0 0.0
        %865 = vmatmul.mubr.f32.gmra.mxu0 %v302
        %v866 = vpop.f32.mrf.mxu0
        %v867 = vadd.f32 0.0, %v866
        %v868 = vpop.f32.mrf.mxu0
        %869 = vdwg.mxu0
        %v871 = vsel %vm297, %v862, 0
        %v874 = vsel %vm297, %v867, 0
        %876 = vmatprep.subr.mxu0 0.0
        %877 = vmatpush1.msra.mxu0 0.0
        %878 = vmatprep.subr.mxu0 0.0
        %879 = vmatpush1.msra.mxu0 0.0
        %880 = vmatprep.subr.mxu0 0.0
        %881 = vmatpush1.msra.mxu0 0.0
        %882 = vmatprep.subr.mxu0 0.0
        %883 = vmatpush1.msra.mxu0 0.0
        %884 = vmatprep.subr.mxu0 0.0
        %885 = vmatpush1.msra.mxu0 0.0
        %886 = vmatprep.subr.mxu0 0.0
        %887 = vmatpush1.msra.mxu0 0.0
        %888 = vmatprep.subr.mxu0 0.0
        %889 = vmatpush1.msra.mxu0 0.0
        %890 = vmatprep.subr.mxu0 0.0
        %891 = vmatpush1.msra.mxu0 0.0
        %892 = vmatprep.subr.mxu0 0.0
        %893 = vmatpush1.msra.mxu0 0.0
        %894 = vmatprep.subr.mxu0 0.0
        %895 = vmatpush1.msra.mxu0 0.0
        %896 = vmatprep.subr.mxu0 0.0
        %897 = vmatpush1.msra.mxu0 0.0
        %898 = vmatprep.subr.mxu0 0.0
        %899 = vmatpush1.msra.mxu0 0.0
        %900 = vmatprep.subr.mxu0 0.0
        %901 = vmatpush1.msra.mxu0 0.0
        %902 = vmatprep.subr.mxu0 0.0
        %903 = vmatpush1.msra.mxu0 0.0
        %904 = vmatprep.subr.mxu0 0.0
        %905 = vmatpush1.msra.mxu0 %v273
        %906 = vmatprep.subr.mxu0 0.0
        %907 = vmatpush1.msra.mxu0 %v272
        %908 = vmatprep.subr.mxu0 0.0
        %909 = vmatpush2.msra.mxu0 0.0
        %910 = vmatprep.subr.mxu0 0.0
        %911 = vmatpush2.msra.mxu0 0.0
        %912 = vmatprep.subr.mxu0 0.0
        %913 = vmatpush2.msra.mxu0 0.0
        %914 = vmatprep.subr.mxu0 0.0
        %915 = vmatpush2.msra.mxu0 0.0
        %916 = vmatprep.subr.mxu0 0.0
        %917 = vmatpush2.msra.mxu0 0.0
        %918 = vmatprep.subr.mxu0 0.0
        %919 = vmatpush2.msra.mxu0 0.0
        %920 = vmatprep.subr.mxu0 0.0
        %921 = vmatpush2.msra.mxu0 0.0
        %922 = vmatprep.subr.mxu0 0.0
        %923 = vmatpush2.msra.mxu0 0.0
        %924 = vmatprep.subr.mxu0 0.0
        %925 = vmatpush2.msra.mxu0 0.0
        %926 = vmatprep.subr.mxu0 0.0
        %927 = vmatpush2.msra.mxu0 0.0
        %928 = vmatprep.subr.mxu0 0.0
        %929 = vmatpush2.msra.mxu0 0.0
        %930 = vmatprep.subr.mxu0 0.0
        %931 = vmatpush2.msra.mxu0 0.0
        %932 = vmatprep.subr.mxu0 0.0
        %933 = vmatpush2.msra.mxu0 0.0
        %934 = vmatprep.subr.mxu0 0.0
        %935 = vmatpush2.msra.mxu0 0.0
        %936 = vmatprep.subr.mxu0 0.0
        %937 = vmatpush2.msra.mxu0 0.0
        %938 = vmatprep.subr.mxu0 0.0
        %939 = vmatpush2.msra.mxu0 0.0
        %940 = vmatprep.mubr.f32.mxu0 0.0
        %941 = vmatmul.mubr.f32.gmra.mxu0 %v871
        %v942 = vpop.f32.mrf.mxu0
        %v943 = vadd.f32 0.0, %v942
        %v944 = vpop.f32.mrf.mxu0
        %945 = vmatprep.mubr.f32.mxu0 0.0
        %946 = vmatmul.mubr.f32.gmra.mxu0 %v874
        %v947 = vpop.f32.mrf.mxu0
        %v948 = vadd.f32 0.0, %v947
        %v949 = vpop.f32.mrf.mxu0
        %950 = vdwg.mxu0
        %v951 = vsel %vm293, %v943, 0.0
        %v952 = vsel %vm294, %v948, 0.0
        %s953 = scalar_lea.vmem %s233, 48 [#allocation5]
        %954 = vst.msk [vmem:[%s953] sm:$0xff] %vm297, %v951
        %955 = vst.msk [vmem:[%s953 + $0x8] sm:$0xff] %vm297, %v952
        %s956 = sand.u32 %s122, 1
        %s957 = scalar_lea.sflag [#allocation4], %s956
        %s958 = sand.u32 %s122, 1
        %s959 = smul.addr %s958, 64
        %s960 = scalar_lea.vmem [#allocation5], %s959
        // Predicated region
        $region37: #{tpu_custom_call.1} parent=31 // pred_check
          %p961 = pneg %p132
        $region38: #{tpu_custom_call.1} parent=31 // pred_check_branch
          %963 = sbr.rel (%p961) target = $region40
        $region39: #{tpu_custom_call.1} parent=31 // pred_region
          %s964 = smul.u32 4, %s25
          %s966 = ssub.s32 1024, 1024
          %967 = vsyncadd %s957, %s966
          %s968 = smul.addr %s964, 2
          %s969 = smul.addr %s24, 8
          %s970 = sadd.s32 %s968, %s969
          %s971 = smul.addr %s970, 128
          %s972 = scalar_lea.hbm %s3, %s971
          %s973 = sshll.u32 %s960, 4
          %s974 = int_to_ptr.vmem [resolvable:$true] %s973
          %979 = dma.vmem_to_hbm [thread:$0]  %s974, 1024, %s972, %s957, 128, 128, 8
        $region40: #{tpu_custom_call.1} parent=31 // pred_fallthru
          _
      $region32: #{tpu_custom_call.1} parent=5 // pred_fallthru
        _
      %p980 = scmp.le.s32.totalorder 2, %s15
      // Predicated region
      $region41: #{tpu_custom_call.1} parent=5 // pred_check
        %p981 = pneg %p980
      $region42: #{tpu_custom_call.1} parent=5 // pred_check_branch
        %983 = sbr.rel (%p981) target = $region44
      $region43: #{tpu_custom_call.1} parent=5 // pred_region
        %s984 = ssub.s32 %s15, 2
        // Predicated region
        $region45: #{tpu_custom_call.1} parent=43 // pred_check
          %p985 = pneg %p138
        $region46: #{tpu_custom_call.1} parent=43 // pred_check_branch
          %987 = sbr.rel (%p985) target = $region48
        $region47: #{tpu_custom_call.1} parent=43 // pred_region
          %s988 = sand.u32 %s123, 1
          %s989 = scalar_lea.sflag [#allocation4], %s988
          %s990 = sand.u32 %s123, 1
          %s991 = smul.addr %s990, 64
          %s992 = scalar_lea.vmem [#allocation5], %s991
          %993 = dma.done %s989, 1024
        $region48: #{tpu_custom_call.1} parent=43 // pred_fallthru
          _
      $region44: #{tpu_custom_call.1} parent=5 // pred_fallthru
        _
    $region6: #{tpu_custom_call.1} parent=1 // loop_footer
      %s19 = sadd.s32 1, %s15
    $region7: #{tpu_custom_call.1} parent=1 // loop_footer_branch
      %14 = sbr.rel target = $region3
    $region8: #{tpu_custom_call.1} parent=1 // loop_exit
      _
    %994 = vsyncpa [#allocation3], 1
    %s995 = scalar_lea.sflag [#allocation3], 1
    %996 = vsyncpa %s995, 1
    %997 = vsyncpa [#allocation4], 1
    %s998 = scalar_lea.sflag [#allocation4], 1
    %999 = vsyncpa %s998, 1

</llo_original>
